<compile_context>
chip_gen: v6e
topology: v6e:2x2x1
jax: 0.10.0
libtpu: 0.0.40
codegen_flags: <defaults>
</compile_context>

<pallas_src>
import functools

import jax
import jax.numpy as jnp
from jax.experimental import pallas as pl
from jax.experimental.pallas import tpu as pltpu

_INV_SQRT2 = 0.7071067811865476


def _cdiv(a: int, b: int) -> int:
    return -(-a // b)


def _round_up(x: int, m: int) -> int:
    return _cdiv(x, m) * m


def _gelu_exact(x):
    # PyTorch nn.GELU() default: exact erf-based GELU, computed in f32.
    return 0.5 * x * (1.0 + jax.lax.erf(x * _INV_SQRT2))


def mlp_kernel(x_ref, w1_ref, b1_ref, w2_ref, b2_ref, o_ref, acc_ref=None):
    """Grid: (row_tiles, k_tiles); k (intermediate dim) is the reduction axis.

      x_ref  : (tm, hidden_p)       constant over k
      w1_ref : (hidden_p, tk)       k-th column block of W1
      b1_ref : (1, tk)              k-th block of b1
      w2_ref : (tk, hidden_p)       k-th row block of W2
      b2_ref : (1, hidden_p)        constant
      o_ref  : (tm, hidden_p)       resident across k (same block index)
      acc_ref: (tm, hidden_p) f32   only present when o_ref is not f32
    """
    acc = o_ref if acc_ref is None else acc_ref
    k = pl.program_id(1)

    @pl.when(k == 0)
    def _():
        acc[...] = jnp.zeros_like(acc)

    # Cast x to the weight dtype (not the other way round): keeps the native
    # bf16 MXU path when the weights are bf16 instead of promoting the whole
    # W1 tile to f32 on every grid step.
    xv = x_ref[...].astype(w1_ref.dtype)
    h = jnp.dot(xv, w1_ref[...], preferred_element_type=jnp.float32)
    h = h + b1_ref[...].astype(jnp.float32)
    h = _gelu_exact(h)  # bias + GELU in f32

    # Second matmul in the weight dtype, f32 accumulation on the MXU.
    acc[...] += jnp.dot(h.astype(w2_ref.dtype), w2_ref[...],
                        preferred_element_type=jnp.float32)

    @pl.when(k == pl.num_programs(1) - 1)
    def _():
        y = acc[...] + b2_ref[...].astype(jnp.float32)
        o_ref[...] = y.astype(o_ref.dtype)


@functools.partial(jax.jit,
                   static_argnames=("tm_max", "tk_max", "vmem_budget_mb"))
def mlp_layer(x, w1, b1, w2, b2, *, tm_max=512, tk_max=512, vmem_budget_mb=48):
    """x: (..., hidden). w1:(hidden,inter), w2:(inter,hidden), biases (1, dim)."""
    hidden = x.shape[-1]
    intermediate = w1.shape[-1]
    orig_shape = x.shape
    out_dtype = x.dtype

    b1 = b1.reshape(1, -1)
    b2 = b2.reshape(1, -1)

    x2 = x.reshape(-1, hidden)
    rows = x2.shape[0]

    x_item = jnp.dtype(x.dtype).itemsize
    w_item = jnp.dtype(w1.dtype).itemsize
    o_item = jnp.dtype(out_dtype).itemsize

    hidden_p = _round_up(hidden, 128)       # lane-dense stores
    inter_128 = _round_up(intermediate, 128)

    # ---- tile-size selection -------------------------------------------
    # Row tile: as large as possible (weight reuse), but split into >= 2 tiles
    # when rows allow so the "parallel" axis can feed both v7x TensorCores.
    rows_8 = _round_up(rows, 8)
    if rows_8 > 8:
        tm = min(tm_max, _round_up(_cdiv(rows_8, 2), 8))
    else:
        tm = 8

    # Reduction tile: pick tk so that n_k * tk barely covers the intermediate
    # dim (never pay for up-to-tk of zero padding).
    n_k = _cdiv(inter_128, tk_max)
    tk = _round_up(_cdiv(inter_128, n_k), 128)

    # f32 outputs accumulate directly into the resident output block; only
    # narrower output dtypes need a separate f32 VMEM accumulator.
    use_scratch = jnp.dtype(out_dtype) != jnp.dtype(jnp.float32)

    def footprint(tm_, tk_):
        fp = 2 * tm_ * hidden_p * x_item       # x tile (double-buffered)
        fp += 2 * hidden_p * tk_ * w_item      # W1 block
        fp += 2 * 8 * tk_ * w_item             # b1 block (sublane-padded)
        fp += 2 * tk_ * hidden_p * w_item      # W2 block
        fp += 2 * 8 * hidden_p * w_item        # b2 block
        fp += 2 * tm_ * hidden_p * o_item      # output block
        if use_scratch:
            fp += tm_ * hidden_p * 4
        return fp

    budget = int(vmem_budget_mb) * 1024 * 1024
    target = int(budget * 0.85)                # leave compiler headroom
    while footprint(tm, tk) > target:
        if tk > 128:
            n_k += 1
            tk = _round_up(_cdiv(inter_128, n_k), 128)
        elif tm > 8:
            tm = max(8, _round_up(tm // 2, 8))
        else:
            # For very large hidden dims the per-block footprint scales with
            # hidden_p itself; tiling the hidden dim would be the next step
            # (not needed for typical transformer sizes).
            break

    inter_p = n_k * tk
    rows_p = _round_up(rows, tm)
    grid = (rows_p // tm, inter_p // tk)

    # ---- padding (only when actually misaligned) -------------------------
    # Zero padding is exact: padded intermediate columns give gelu(0) = 0 and
    # the matching W2 rows are zero; padded hidden columns are sliced off.
    # For production, pre-pad the weights once at init so these are no-ops.
    def maybe_pad(a, target_shape):
        pads = tuple((0, t - s) for s, t in zip(a.shape, target_shape))
        if any(p for _, p in pads):
            a = jnp.pad(a, pads)
        return a

    x2p = maybe_pad(x2, (rows_p, hidden_p))
    w1p = maybe_pad(w1, (hidden_p, inter_p))
    b1p = maybe_pad(b1, (1, inter_p))
    w2p = maybe_pad(w2, (inter_p, hidden_p))
    b2p = maybe_pad(b2, (1, hidden_p))

    cost = pl.CostEstimate(
        flops=4 * rows_p * hidden_p * inter_p,
        transcendentals=rows_p * inter_p,
        bytes_accessed=(
            rows_p * hidden_p * (x_item + o_item)
            # Weights are re-streamed once per row tile.
            + grid[0] * (w1p.size + w2p.size + b1p.size + b2p.size) * w_item
        ),
    )

    scratch_shapes = (
        [pltpu.VMEM((tm, hidden_p), jnp.float32)] if use_scratch else []
    )

    out_p = pl.pallas_call(
        mlp_kernel,
        out_shape=jax.ShapeDtypeStruct((rows_p, hidden_p), out_dtype),
        grid_spec=pltpu.PrefetchScalarGridSpec(
            num_scalar_prefetch=0,
            grid=grid,
            in_specs=[
                pl.BlockSpec((tm, hidden_p), lambda i, k: (i, 0)),
                pl.BlockSpec((hidden_p, tk), lambda i, k: (0, k)),
                pl.BlockSpec((1, tk), lambda i, k: (0, k)),
                pl.BlockSpec((tk, hidden_p), lambda i, k: (k, 0)),
                pl.BlockSpec((1, hidden_p), lambda i, k: (0, 0)),
            ],
            out_specs=pl.BlockSpec((tm, hidden_p), lambda i, k: (i, 0)),
            scratch_shapes=scratch_shapes,
        ),
        compiler_params=pltpu.CompilerParams(
            dimension_semantics=("parallel", "arbitrary"),
            vmem_limit_bytes=budget,
        ),
        cost_estimate=cost,
    )(x2p, w1p, b1p, w2p, b2p)

    return out_p[:rows, :hidden].reshape(orig_shape)


def init_params(key, hidden_dim, intermediate_dim, dtype=jnp.float32):
    """Deterministic init matching nn.Linear shapes.

    PyTorch Linear stores weight as (out, in); we pre-transpose to (in, out)
    so the kernel computes x @ W + b directly.
    """
    k1, k2, k3, k4 = jax.random.split(key, 4)
    bound1 = 1.0 / jnp.sqrt(hidden_dim)
    bound2 = 1.0 / jnp.sqrt(intermediate_dim)
    w1 = jax.random.uniform(k1, (hidden_dim, intermediate_dim), dtype,
                            -bound1, bound1)
    b1 = jax.random.uniform(k2, (1, intermediate_dim), dtype, -bound1, bound1)
    w2 = jax.random.uniform(k3, (intermediate_dim, hidden_dim), dtype,
                            -bound2, bound2)
    b2 = jax.random.uniform(k4, (1, hidden_dim), dtype, -bound2, bound2)
    return w1, b1, w2, b2


if __name__ == "__main__":
    batch, seq, hidden_dim, intermediate_dim = 2, 8, 32, 64

    key = jax.random.PRNGKey(0)
    kx, kp = jax.random.split(key)
    x = jax.random.normal(kx, (batch, seq, hidden_dim), jnp.float32)
    w1, b1, w2, b2 = init_params(kp, hidden_dim, intermediate_dim)

    out = mlp_layer(x, w1, b1, w2, b2)
    jax.block_until_ready(out)

    # Pure-JAX reference (exact erf GELU, matching nn.GELU() default).
    def ref(xx):
        h = jnp.dot(xx, w1, precision=jax.lax.Precision.HIGHEST) + b1
        h = 0.5 * h * (1.0 + jax.lax.erf(h * _INV_SQRT2))
        return jnp.dot(h, w2, precision=jax.lax.Precision.HIGHEST) + b2

    expected = ref(x)
    assert out.shape == x.shape
    # Tolerance covers possible MXU pass-precision differences between the
    # in-kernel f32 matmuls and the HIGHEST-precision XLA reference; a broken
    # kernel would be off by O(0.1-1).
    err = float(jnp.max(jnp.abs(out - expected)))
    assert jnp.allclose(out, expected, atol=1e-2, rtol=1e-2), f"max err {err}"

    print("KERNEL_OK")
</pallas_src>

<mosaic_0001>
module attributes {stable_mosaic.version = 11 : i64} {
  func.func @mlp_kernel(%arg0: i32, %arg1: i32, %arg2: memref<8x128xf32, #tpu.memory_space<vmem>>, %arg3: memref<128x128xf32, #tpu.memory_space<vmem>>, %arg4: memref<1x128xf32, #tpu.memory_space<vmem>>, %arg5: memref<128x128xf32, #tpu.memory_space<vmem>>, %arg6: memref<1x128xf32, #tpu.memory_space<vmem>>, %arg7: memref<8x128xf32, #tpu.memory_space<vmem>>) attributes {dimension_semantics = [#tpu.dimension_semantics<parallel>, #tpu.dimension_semantics<arbitrary>], iteration_bounds = array<i64: 2, 1>, scalar_prefetch = 0 : i64, scratch_operands = 0 : i64, tpu.core_type = #tpu.core_type<tc>, window_params = [{transform_indices = @transform_0, window_bounds = array<i64: 8, 128>}, {transform_indices = @transform_1, window_bounds = array<i64: 128, 128>}, {transform_indices = @transform_2, window_bounds = array<i64: 1, 128>}, {transform_indices = @transform_3, window_bounds = array<i64: 128, 128>}, {pipeline_mode = #tpu.pipeline_mode<synchronous>, transform_indices = @transform_4, window_bounds = array<i64: 1, 128>}, {transform_indices = @transform_5, window_bounds = array<i64: 8, 128>}]} {
    %c0_i32 = arith.constant 0 : i32
    %0 = arith.cmpi eq, %arg1, %c0_i32 : i32
    %1 = arith.extui %0 : i1 to i32
    %c0_i32_0 = arith.constant 0 : i32
    %2 = arith.cmpi ne, %1, %c0_i32_0 : i32
    scf.if %2 {
      %cst_18 = arith.constant 0.000000e+00 : f32
      %25 = vector.broadcast %cst_18 : f32 to vector<8x128xf32>
      %c0_19 = arith.constant 0 : index
      %c0_20 = arith.constant 0 : index
      %26 = vector.load %arg7[%c0_19, %c0_20] : memref<8x128xf32, #tpu.memory_space<vmem>>, vector<8x128xf32>
      tpu.vector_store %arg7[%c0_19, %c0_20], %25 {strides = array<i32>} : memref<8x128xf32, #tpu.memory_space<vmem>>, vector<8x128xf32>,
    } else {
    }
    %c0 = arith.constant 0 : index
    %c0_1 = arith.constant 0 : index
    %3 = vector.load %arg2[%c0, %c0_1] : memref<8x128xf32, #tpu.memory_space<vmem>>, vector<8x128xf32>
    %c0_2 = arith.constant 0 : index
    %c0_3 = arith.constant 0 : index
    %4 = vector.load %arg3[%c0_2, %c0_3] : memref<128x128xf32, #tpu.memory_space<vmem>>, vector<128x128xf32>
    %cst = arith.constant dense<0.000000e+00> : vector<8x128xf32>
    %5 = tpu.matmul %3, %4, %cst {dimension_numbers = #tpu.dot_dimension_numbers<[1], [0], [0], [1], [0, 0, 1, 1], [], []>} : vector<8x128xf32>, vector<128x128xf32>, vector<8x128xf32> -> vector<8x128xf32>
    %c0_4 = arith.constant 0 : index
    %c0_5 = arith.constant 0 : index
    %6 = vector.load %arg4[%c0_4, %c0_5] : memref<1x128xf32, #tpu.memory_space<vmem>>, vector<1x128xf32>
    %7 = vector.broadcast %6 : vector<1x128xf32> to vector<8x128xf32>
    %8 = arith.addf %5, %7 : vector<8x128xf32>
    %cst_6 = arith.constant 5.000000e-01 : f32
    %9 = vector.broadcast %cst_6 : f32 to vector<8x128xf32>
    %10 = arith.mulf %9, %8 : vector<8x128xf32>
    %cst_7 = arith.constant 0.707106769 : f32
    %11 = vector.broadcast %cst_7 : f32 to vector<8x128xf32>
    %12 = arith.mulf %8, %11 : vector<8x128xf32>
    %13 = math.erf %12 : vector<8x128xf32>
    %cst_8 = arith.constant 1.000000e+00 : f32
    %14 = vector.broadcast %cst_8 : f32 to vector<8x128xf32>
    %15 = arith.addf %14, %13 : vector<8x128xf32>
    %16 = arith.mulf %10, %15 : vector<8x128xf32>
    %c0_9 = arith.constant 0 : index
    %c0_10 = arith.constant 0 : index
    %17 = vector.load %arg7[%c0_9, %c0_10] : memref<8x128xf32, #tpu.memory_space<vmem>>, vector<8x128xf32>
    %c0_11 = arith.constant 0 : index
    %c0_12 = arith.constant 0 : index
    %18 = vector.load %arg5[%c0_11, %c0_12] : memref<128x128xf32, #tpu.memory_space<vmem>>, vector<128x128xf32>
    %cst_13 = arith.constant dense<0.000000e+00> : vector<8x128xf32>
    %19 = tpu.matmul %16, %18, %cst_13 {dimension_numbers = #tpu.dot_dimension_numbers<[1], [0], [0], [1], [0, 0, 1, 1], [], []>} : vector<8x128xf32>, vector<128x128xf32>, vector<8x128xf32> -> vector<8x128xf32>
    %20 = arith.addf %17, %19 : vector<8x128xf32>
    %c0_14 = arith.constant 0 : index
    %c0_15 = arith.constant 0 : index
    %21 = vector.load %arg7[%c0_14, %c0_15] : memref<8x128xf32, #tpu.memory_space<vmem>>, vector<8x128xf32>
    tpu.vector_store %arg7[%c0_14, %c0_15], %20 {strides = array<i32>} : memref<8x128xf32, #tpu.memory_space<vmem>>, vector<8x128xf32>,
    %c0_i32_16 = arith.constant 0 : i32
    %22 = arith.cmpi eq, %arg1, %c0_i32_16 : i32
    %23 = arith.extui %22 : i1 to i32
    %c0_i32_17 = arith.constant 0 : i32
    %24 = arith.cmpi ne, %23, %c0_i32_17 : i32
    scf.if %24 {
      %c0_18 = arith.constant 0 : index
      %c0_19 = arith.constant 0 : index
      %25 = vector.load %arg7[%c0_18, %c0_19] : memref<8x128xf32, #tpu.memory_space<vmem>>, vector<8x128xf32>
      %c0_20 = arith.constant 0 : index
      %c0_21 = arith.constant 0 : index
      %26 = vector.load %arg6[%c0_20, %c0_21] : memref<1x128xf32, #tpu.memory_space<vmem>>, vector<1x128xf32>
      %27 = vector.broadcast %26 : vector<1x128xf32> to vector<8x128xf32>
      %28 = arith.addf %25, %27 : vector<8x128xf32>
      %c0_22 = arith.constant 0 : index
      %c0_23 = arith.constant 0 : index
      %29 = vector.load %arg7[%c0_22, %c0_23] : memref<8x128xf32, #tpu.memory_space<vmem>>, vector<8x128xf32>
      tpu.vector_store %arg7[%c0_22, %c0_23], %28 {strides = array<i32>} : memref<8x128xf32, #tpu.memory_space<vmem>>, vector<8x128xf32>,
    } else {
    }
    return
  }
  func.func @transform_0(%arg0: i32, %arg1: i32) -> (i32, i32) {
    %c0_i32 = arith.constant 0 : i32
    %c0_i32_0 = arith.constant 0 : i32
    return %arg0, %c0_i32 : i32, i32
  }
  func.func @transform_1(%arg0: i32, %arg1: i32) -> (i32, i32) {
    %c0_i32 = arith.constant 0 : i32
    %c0_i32_0 = arith.constant 0 : i32
    return %c0_i32, %arg1 : i32, i32
  }
  func.func @transform_2(%arg0: i32, %arg1: i32) -> (i32, i32) {
    %c0_i32 = arith.constant 0 : i32
    %c0_i32_0 = arith.constant 0 : i32
    return %c0_i32, %arg1 : i32, i32
  }
  func.func @transform_3(%arg0: i32, %arg1: i32) -> (i32, i32) {
    %c0_i32 = arith.constant 0 : i32
    %c0_i32_0 = arith.constant 0 : i32
    return %arg1, %c0_i32 : i32, i32
  }
  func.func @transform_4(%arg0: i32, %arg1: i32) -> (i32, i32) {
    %c0_i32 = arith.constant 0 : i32
    %c0_i32_0 = arith.constant 0 : i32
    %c0_i32_1 = arith.constant 0 : i32
    return %c0_i32, %c0_i32_0 : i32, i32
  }
  func.func @transform_5(%arg0: i32, %arg1: i32) -> (i32, i32) {
    %c0_i32 = arith.constant 0 : i32
    %c0_i32_0 = arith.constant 0 : i32
    return %arg0, %c0_i32 : i32, i32
  }
}

</mosaic_0001>

<llo_original>
// kernel: mlp_layer.1
$region0: #{mlp_layer.1}
  #allocation0 [shape = 'u32[]', space=smem, size = 0x4, offset = 0x4, fixed_abs, tag = 'smem constant byte address 0x4 - core index']
  #allocation1 [shape = 'u32[144,128]{1,0:T(1,128)}', space=vmem, size = 0x12000, scoped, tag = 'internal scratch']
  %s0 = inlined_call_operand.vmem [shape: f32[16,128], index: 0, kind: input, shape index: {}]
  %s1 = inlined_call_operand.vmem [shape: f32[128,128], index: 1, kind: input, shape index: {}]
  %s2 = inlined_call_operand.vmem [shape: f32[1,128], index: 2, kind: input, shape index: {}]
  %s3 = inlined_call_operand.vmem [shape: f32[128,128], index: 3, kind: input, shape index: {}]
  %s4 = inlined_call_operand.vmem [shape: f32[1,128], index: 4, kind: input, shape index: {}]
  %s5 = inlined_call_operand.vmem [shape: f32[16,128], index: 5, kind: output, shape index: {}]
  %s6 = sld [smem:[#allocation0]]
  $region61: #{mlp_layer.1} parent=0
    _
  %s8 = ssub.s32 1, %s6
  %s9 = scalar_select 0, %s8, %s6
  loop: start=0, step=1, limit=4
  $region2: #{mlp_layer.1} parent=0 // loop_pre_header
    _
  $region3: #{mlp_layer.1} parent=0 // loop_header
    %s11 = sphi 0, %s15
    %p12 = scmp.ge.s32.totalorder %s11, 4
    %s18 = sphi 0, %s30
    %s19 = sphi 0, %s26
    %s20 = sphi 0, %s18
    %s21 = sphi 0, %s19
    %s22 = sphi 0, %s20
    %s23 = sphi 0, %s21
    %s33 = sphi 0, %s35
    %s36 = sphi 0, %s33
    %s37 = sphi 0, %s36
    %s53 = sphi 0, %s37
    %s59 = sphi 0, %s61
    %s62 = sphi 0, %s59
    %s63 = sphi 0, %s62
    %s79 = sphi 0, %s63
    %s85 = sphi 0, %s87
    %s88 = sphi 0, %s85
    %s89 = sphi 0, %s88
    %s105 = sphi 0, %s89
    %s111 = sphi 0, %s113
    %s114 = sphi 0, %s111
    %s115 = sphi 0, %s114
    %s131 = sphi 0, %s115
    %s135 = sphi 0, %s135
    %s137 = sphi 0, %s135
    %s138 = sphi 0, %s137
    %s152 = sphi 0, %s138
    %s158 = sphi 0, %s160
    %s161 = sphi 0, %s158
    %s162 = sphi 0, %s161
    %s178 = sphi 0, %s162
  $region4: #{mlp_layer.1} parent=0 // loop_header_branch
    %14 = sbr.rel (%p12) target = $region8
  $region5: #{mlp_layer.1} parent=0 // loop_body
    %s16 = ssub.s32 %s11, 1
    %s17 = ssub.s32 %s11, 2
    %s24 = sadd.s32 1, %s19
    %p25 = scmp.ge.s32.totalorder %s24, 1
    %s26 = scalar_select %p25, 0, %s24
    %s27 = sadd.s32 1, %s18
    %s28 = scalar_select %p25, %s27, %s18
    %p29 = scmp.ge.s32.totalorder %s28, 2
    %s30 = scalar_select %p29, 0, %s28
    %s31 = ssub.s32 %s18, %s30
    %p32 = scmp.eq.s32.totalorder %s31, 0
    %s34 = sadd.s32 %s33, 1
    %s35 = scalar_select %p32, %s33, %s34
    %p38 = pneg %p32
    %p39 = scmp.eq.s32.totalorder %s11, 1
    %p40 = por %p38, %p39
    %p41 = scmp.ne.s32.totalorder %s33, %s36
    %p42 = scmp.eq.s32.totalorder %s11, 0
    %p43 = por %p41, %p42
    %p44 = scmp.ne.s32.totalorder %s33, %s36
    %p45 = scmp.eq.s32.totalorder %s16, 1
    %p46 = por %p44, %p45
    %p47 = scmp.ne.s32.totalorder %s36, %s37
    %p48 = scmp.eq.s32.totalorder %s16, 0
    %p49 = por %p47, %p48
    %p50 = scmp.ne.s32.totalorder %s36, %s37
    %p51 = scmp.eq.s32.totalorder %s17, 1
    %p52 = por %p50, %p51
    %p54 = scmp.ne.s32.totalorder %s37, %s53
    %p55 = scmp.eq.s32.totalorder %s17, 0
    %p56 = por %p54, %p55
    %s57 = ssub.s32 %s19, %s26
    %p58 = scmp.eq.s32.totalorder %s57, 0
    %s60 = sadd.s32 %s59, 1
    %s61 = scalar_select %p58, %s59, %s60
    %p64 = pneg %p58
    %p65 = scmp.eq.s32.totalorder %s11, 1
    %p66 = por %p64, %p65
    %p67 = scmp.ne.s32.totalorder %s59, %s62
    %p68 = scmp.eq.s32.totalorder %s11, 0
    %p69 = por %p67, %p68
    %p70 = scmp.ne.s32.totalorder %s59, %s62
    %p71 = scmp.eq.s32.totalorder %s16, 1
    %p72 = por %p70, %p71
    %p73 = scmp.ne.s32.totalorder %s62, %s63
    %p74 = scmp.eq.s32.totalorder %s16, 0
    %p75 = por %p73, %p74
    %p76 = scmp.ne.s32.totalorder %s62, %s63
    %p77 = scmp.eq.s32.totalorder %s17, 1
    %p78 = por %p76, %p77
    %p80 = scmp.ne.s32.totalorder %s63, %s79
    %p81 = scmp.eq.s32.totalorder %s17, 0
    %p82 = por %p80, %p81
    %s83 = ssub.s32 %s19, %s26
    %p84 = scmp.eq.s32.totalorder %s83, 0
    %s86 = sadd.s32 %s85, 1
    %s87 = scalar_select %p84, %s85, %s86
    %p90 = pneg %p84
    %p91 = scmp.eq.s32.totalorder %s11, 1
    %p92 = por %p90, %p91
    %p93 = scmp.ne.s32.totalorder %s85, %s88
    %p94 = scmp.eq.s32.totalorder %s11, 0
    %p95 = por %p93, %p94
    %p96 = scmp.ne.s32.totalorder %s85, %s88
    %p97 = scmp.eq.s32.totalorder %s16, 1
    %p98 = por %p96, %p97
    %p99 = scmp.ne.s32.totalorder %s88, %s89
    %p100 = scmp.eq.s32.totalorder %s16, 0
    %p101 = por %p99, %p100
    %p102 = scmp.ne.s32.totalorder %s88, %s89
    %p103 = scmp.eq.s32.totalorder %s17, 1
    %p104 = por %p102, %p103
    %p106 = scmp.ne.s32.totalorder %s89, %s105
    %p107 = scmp.eq.s32.totalorder %s17, 0
    %p108 = por %p106, %p107
    %s109 = ssub.s32 %s19, %s26
    %p110 = scmp.eq.s32.totalorder %s109, 0
    %s112 = sadd.s32 %s111, 1
    %s113 = scalar_select %p110, %s111, %s112
    %p116 = pneg %p110
    %p117 = scmp.eq.s32.totalorder %s11, 1
    %p118 = por %p116, %p117
    %p119 = scmp.ne.s32.totalorder %s111, %s114
    %p120 = scmp.eq.s32.totalorder %s11, 0
    %p121 = por %p119, %p120
    %p122 = scmp.ne.s32.totalorder %s111, %s114
    %p123 = scmp.eq.s32.totalorder %s16, 1
    %p124 = por %p122, %p123
    %p125 = scmp.ne.s32.totalorder %s114, %s115
    %p126 = scmp.eq.s32.totalorder %s16, 0
    %p127 = por %p125, %p126
    %p128 = scmp.ne.s32.totalorder %s114, %s115
    %p129 = scmp.eq.s32.totalorder %s17, 1
    %p130 = por %p128, %p129
    %p132 = scmp.ne.s32.totalorder %s115, %s131
    %p133 = scmp.eq.s32.totalorder %s17, 0
    %p134 = por %p132, %p133
    %s136 = sadd.s32 %s135, 1
    %p139 = scmp.eq.s32.totalorder %s11, 1
    %p140 = scmp.ne.s32.totalorder %s135, %s137
    %p141 = scmp.eq.s32.totalorder %s11, 0
    %p142 = por %p140, %p141
    %p143 = scmp.ne.s32.totalorder %s135, %s137
    %p144 = scmp.eq.s32.totalorder %s16, 1
    %p145 = por %p143, %p144
    %p146 = scmp.ne.s32.totalorder %s137, %s138
    %p147 = scmp.eq.s32.totalorder %s16, 0
    %p148 = por %p146, %p147
    %p149 = scmp.ne.s32.totalorder %s137, %s138
    %p150 = scmp.eq.s32.totalorder %s17, 1
    %p151 = por %p149, %p150
    %p153 = scmp.ne.s32.totalorder %s138, %s152
    %p154 = scmp.eq.s32.totalorder %s17, 0
    %p155 = por %p153, %p154
    %s156 = ssub.s32 %s18, %s30
    %p157 = scmp.eq.s32.totalorder %s156, 0
    %s159 = sadd.s32 %s158, 1
    %s160 = scalar_select %p157, %s158, %s159
    %p163 = pneg %p157
    %p164 = scmp.eq.s32.totalorder %s11, 1
    %p165 = por %p163, %p164
    %p166 = scmp.ne.s32.totalorder %s158, %s161
    %p167 = scmp.eq.s32.totalorder %s11, 0
    %p168 = por %p166, %p167
    %p169 = scmp.ne.s32.totalorder %s158, %s161
    %p170 = scmp.eq.s32.totalorder %s16, 1
    %p171 = por %p169, %p170
    %p172 = scmp.ne.s32.totalorder %s161, %s162
    %p173 = scmp.eq.s32.totalorder %s16, 0
    %p174 = por %p172, %p173
    %p175 = scmp.ne.s32.totalorder %s161, %s162
    %p176 = scmp.eq.s32.totalorder %s17, 1
    %p177 = por %p175, %p176
    %p179 = scmp.ne.s32.totalorder %s162, %s178
    %p180 = scmp.eq.s32.totalorder %s17, 0
    %p181 = por %p179, %p180
    %p182 = scmp.le.s32.totalorder 1, %s11
    %p183 = scmp.lt.s32.totalorder %s11, 3
    %p184 = pnand %p182, %p183
    %p185 = pneg %p184
    // Predicated region
    $region9: #{mlp_layer.1} parent=5 // pred_check
      _
    $region10: #{mlp_layer.1} parent=5 // pred_check_branch
      %187 = sbr.rel (%p184) target = $region12
    $region11: #{mlp_layer.1} parent=5 // pred_region
      %s188 = ssub.s32 %s11, 1
      // Predicated region
      $region13: #{mlp_layer.1} parent=11 // pred_check
        %p189 = pneg %p75
      $region14: #{mlp_layer.1} parent=11 // pred_check_branch
        %191 = sbr.rel (%p189) target = $region16
      $region15: #{mlp_layer.1} parent=11 // pred_region
        %p192 = scmp.lt.s32.totalorder %s21, 0
        %s193 = scalar_select %p192, %s21, 0
        %s194 = smul.addr %s193, 8
        %s195 = scalar_lea.vmem %s1, %s194
      $region16: #{mlp_layer.1} parent=11 // pred_fallthru
        _
      // Predicated region
      $region17: #{mlp_layer.1} parent=11 // pred_check
        %p196 = pneg %p101
      $region18: #{mlp_layer.1} parent=11 // pred_check_branch
        %198 = sbr.rel (%p196) target = $region20
      $region19: #{mlp_layer.1} parent=11 // pred_region
        %p199 = scmp.lt.s32.totalorder %s21, 0
        %s200 = scalar_select %p199, %s21, 0
        %s201 = scalar_lea.vmem %s2, %s200
      $region20: #{mlp_layer.1} parent=11 // pred_fallthru
        _
      // Predicated region
      $region21: #{mlp_layer.1} parent=11 // pred_check
        %p202 = pneg %p127
      $region22: #{mlp_layer.1} parent=11 // pred_check_branch
        %204 = sbr.rel (%p202) target = $region24
      $region23: #{mlp_layer.1} parent=11 // pred_region
        %s205 = smul.u32 16, %s21
        %p206 = scmp.lt.s32.totalorder %s205, 15
        %s207 = scalar_select %p206, %s205, 15
        %s208 = smul.addr %s207, 8
        %s209 = scalar_lea.vmem %s3, %s208
        %s210 = smul.u32 16, %s21
      $region24: #{mlp_layer.1} parent=11 // pred_fallthru
        _
      // Predicated region
      $region25: #{mlp_layer.1} parent=11 // pred_check
        %p211 = pneg %p148
      $region26: #{mlp_layer.1} parent=11 // pred_check_branch
        %213 = sbr.rel (%p211) target = $region28
      $region27: #{mlp_layer.1} parent=11 // pred_region
        _
      $region28: #{mlp_layer.1} parent=11 // pred_fallthru
        _
    $region12: #{mlp_layer.1} parent=5 // pred_fallthru
      _
    %p214 = scmp.lt.s32.totalorder %s11, 2
    // Predicated region
    $region29: #{mlp_layer.1} parent=5 // pred_check
      %p215 = pneg %p214
    $region30: #{mlp_layer.1} parent=5 // pred_check_branch
      %217 = sbr.rel (%p215) target = $region32
    $region31: #{mlp_layer.1} parent=5 // pred_region
      // Predicated region
      $region33: #{mlp_layer.1} parent=31 // pred_check
        %p218 = pneg %p43
      $region34: #{mlp_layer.1} parent=31 // pred_check_branch
        %220 = sbr.rel (%p218) target = $region36
      $region35: #{mlp_layer.1} parent=31 // pred_region
        %p221 = scmp.lt.s32.totalorder %s18, 1
        %s222 = scalar_select %p221, %s18, 1
        %s223 = smul.addr %s222, 8
        %s224 = scalar_lea.vmem %s0, %s223
      $region36: #{mlp_layer.1} parent=31 // pred_fallthru
        _
    $region32: #{mlp_layer.1} parent=5 // pred_fallthru
      _
    %p225 = scmp.le.s32.totalorder 1, %s11
    %p226 = scmp.lt.s32.totalorder %s11, 3
    %p227 = pnand %p225, %p226
    %p228 = pneg %p227
    // Predicated region
    $region37: #{mlp_layer.1} parent=5 // pred_check
      _
    $region38: #{mlp_layer.1} parent=5 // pred_check_branch
      %230 = sbr.rel (%p227) target = $region40
    $region39: #{mlp_layer.1} parent=5 // pred_region
      %s231 = ssub.s32 %s11, 1
      %p232 = scmp.lt.s32.totalorder %s20, 1
      %s233 = scalar_select %p232, %s20, 1
      %s234 = smul.addr %s233, 8
      %s235 = scalar_lea.vmem %s0, %s234
      %p236 = pneg %p49
      %p237 = pneg %p46
      %p238 = scmp.lt.s32.totalorder %s21, 0
      %s239 = scalar_select %p238, %s21, 0
      %s240 = smul.addr %s239, 8
      %s241 = scalar_lea.vmem %s1, %s240
      %p242 = pneg %p75
      %p243 = pneg %p72
      %p244 = scmp.lt.s32.totalorder %s21, 0
      %s245 = scalar_select %p244, %s21, 0
      %s246 = scalar_lea.vmem %s2, %s245
      %p247 = pneg %p101
      %p248 = pneg %p98
      %s249 = smul.u32 16, %s21
      %p250 = scmp.lt.s32.totalorder %s249, 15
      %s251 = scalar_select %p250, %s249, 15
      %s252 = smul.addr %s251, 8
      %s253 = scalar_lea.vmem %s3, %s252
      %p254 = pneg %p127
      %p255 = pneg %p124
      %p256 = pneg %p148
      %p257 = pneg %p145
      %p258 = pneg %p174
      %p259 = pneg %p171
      %p260 = scmp.lt.s32.totalorder %s20, 1
      %s261 = scalar_select %p260, %s20, 1
      %s262 = smul.addr %s261, 8
      %s263 = scalar_lea.vmem %s5, %s262
      %p264 = scmp.lt.s32.totalorder %s20, 1
      %s265 = scalar_select %p264, %s20, 1
      %s266 = smul.addr %s265, 8
      %s267 = scalar_lea.vmem %s0, %s266
      %p268 = scmp.lt.s32.totalorder %s21, 0
      %s269 = scalar_select %p268, %s21, 0
      %s270 = smul.addr %s269, 8
      %s271 = scalar_lea.vmem %s1, %s270
      %p272 = scmp.lt.s32.totalorder %s21, 0
      %s273 = scalar_select %p272, %s21, 0
      %s274 = scalar_lea.vmem %s2, %s273
      %s275 = smul.u32 16, %s21
      %p276 = scmp.lt.s32.totalorder %s275, 15
      %s277 = scalar_select %p276, %s275, 15
      %s278 = smul.addr %s277, 8
      %s279 = scalar_lea.vmem %s3, %s278
      %s280 = smul.u32 16, %s21
      %p281 = scmp.lt.s32.totalorder %s20, 1
      %s282 = scalar_select %p281, %s20, 1
      %s283 = smul.addr %s282, 8
      %s284 = scalar_lea.vmem %s5, %s283
      %p285 = scmp.eq.s32.totalorder %s21, 0
      // Predicated region
      $region41: #{mlp_layer.1} parent=39 // pred_check
        %p286 = pneg %p285
      $region42: #{mlp_layer.1} parent=39 // pred_check_branch
        %288 = sbr.rel (%p286) target = $region44
      $region43: #{mlp_layer.1} parent=39 // pred_region
        %289 = vst [vmem:[%s284] sm:$0xff] 0.0
      $region44: #{mlp_layer.1} parent=39 // pred_fallthru
        _
      %v290 = vld [vmem:[%s267] sm:$0xff]
      %v291 = vld [vmem:[%s271] sm:$0xff]
      %v292 = vld [vmem:[%s271 + $0x8] sm:$0xff]
      %v293 = vld [vmem:[%s271 + $0x10] sm:$0xff]
      %v294 = vld [vmem:[%s271 + $0x18] sm:$0xff]
      %v295 = vld [vmem:[%s271 + $0x20] sm:$0xff]
      %v296 = vld [vmem:[%s271 + $0x28] sm:$0xff]
      %v297 = vld [vmem:[%s271 + $0x30] sm:$0xff]
      %v298 = vld [vmem:[%s271 + $0x38] sm:$0xff]
      %v299 = vld [vmem:[%s271 + $0x40] sm:$0xff]
      %v300 = vld [vmem:[%s271 + $0x48] sm:$0xff]
      %v301 = vld [vmem:[%s271 + $0x50] sm:$0xff]
      %v302 = vld [vmem:[%s271 + $0x58] sm:$0xff]
      %v303 = vld [vmem:[%s271 + $0x60] sm:$0xff]
      %v304 = vld [vmem:[%s271 + $0x68] sm:$0xff]
      %v305 = vld [vmem:[%s271 + $0x70] sm:$0xff]
      %v306 = vld [vmem:[%s271 + $0x78] sm:$0xff]
      %v307 = vld [vmem:[%s274] sm:$0x1]
      %v309 = vlaneseq
      %v310 = vshrl.u32 %v309, 7
      %v311 = vsub.s32 0, %v310
      %v312 = vrot.slane %v307, %v311
      %314 = vmatprep.subr.mxu0 0.0
      %315 = vmatpush1.msra.mxu0 %v306
      %316 = vmatprep.subr.mxu0 0.0
      %317 = vmatpush1.msra.mxu0 %v305
      %318 = vmatprep.subr.mxu0 0.0
      %319 = vmatpush1.msra.mxu0 %v304
      %320 = vmatprep.subr.mxu0 0.0
      %321 = vmatpush1.msra.mxu0 %v303
      %322 = vmatprep.subr.mxu0 0.0
      %323 = vmatpush1.msra.mxu0 %v302
      %324 = vmatprep.subr.mxu0 0.0
      %325 = vmatpush1.msra.mxu0 %v301
      %326 = vmatprep.subr.mxu0 0.0
      %327 = vmatpush1.msra.mxu0 %v300
      %328 = vmatprep.subr.mxu0 0.0
      %329 = vmatpush1.msra.mxu0 %v299
      %330 = vmatprep.subr.mxu0 0.0
      %331 = vmatpush1.msra.mxu0 %v298
      %332 = vmatprep.subr.mxu0 0.0
      %333 = vmatpush1.msra.mxu0 %v297
      %334 = vmatprep.subr.mxu0 0.0
      %335 = vmatpush1.msra.mxu0 %v296
      %336 = vmatprep.subr.mxu0 0.0
      %337 = vmatpush1.msra.mxu0 %v295
      %338 = vmatprep.subr.mxu0 0.0
      %339 = vmatpush1.msra.mxu0 %v294
      %340 = vmatprep.subr.mxu0 0.0
      %341 = vmatpush1.msra.mxu0 %v293
      %342 = vmatprep.subr.mxu0 0.0
      %343 = vmatpush1.msra.mxu0 %v292
      %344 = vmatprep.subr.mxu0 0.0
      %345 = vmatpush1.msra.mxu0 %v291
      %346 = vmatprep.subr.mxu0 0.0
      %347 = vmatpush2.msra.mxu0 0.0
      %348 = vmatprep.subr.mxu0 0.0
      %349 = vmatpush2.msra.mxu0 0.0
      %350 = vmatprep.subr.mxu0 0.0
      %351 = vmatpush2.msra.mxu0 0.0
      %352 = vmatprep.subr.mxu0 0.0
      %353 = vmatpush2.msra.mxu0 0.0
      %354 = vmatprep.subr.mxu0 0.0
      %355 = vmatpush2.msra.mxu0 0.0
      %356 = vmatprep.subr.mxu0 0.0
      %357 = vmatpush2.msra.mxu0 0.0
      %358 = vmatprep.subr.mxu0 0.0
      %359 = vmatpush2.msra.mxu0 0.0
      %360 = vmatprep.subr.mxu0 0.0
      %361 = vmatpush2.msra.mxu0 0.0
      %362 = vmatprep.subr.mxu0 0.0
      %363 = vmatpush2.msra.mxu0 0.0
      %364 = vmatprep.subr.mxu0 0.0
      %365 = vmatpush2.msra.mxu0 0.0
      %366 = vmatprep.subr.mxu0 0.0
      %367 = vmatpush2.msra.mxu0 0.0
      %368 = vmatprep.subr.mxu0 0.0
      %369 = vmatpush2.msra.mxu0 0.0
      %370 = vmatprep.subr.mxu0 0.0
      %371 = vmatpush2.msra.mxu0 0.0
      %372 = vmatprep.subr.mxu0 0.0
      %373 = vmatpush2.msra.mxu0 0.0
      %374 = vmatprep.subr.mxu0 0.0
      %375 = vmatpush2.msra.mxu0 0.0
      %376 = vmatprep.subr.mxu0 0.0
      %377 = vmatpush2.msra.mxu0 0.0
      %378 = vmatprep.mubr.f32.mxu0 0.0
      %379 = vmatmul.mubr.f32.gmra.mxu0 %v290
      %v380 = vpop.f32.mrf.mxu0
      %v381 = vadd.f32 %v312, %v380
      %v382 = vpop.f32.mrf.mxu0
      %383 = vdwg.mxu0
      %v384 = vmul.f32 %v381, 0.5
      %v385 = vmul.f32 %v381, 0.70710677
      %v386 = verf.f32.pop %v385
      %v387 = vadd.f32 %v386, 1.0
      %v388 = vmul.f32 %v384, %v387
      %v389 = vld [vmem:[%s284] sm:$0xff]
      %v390 = vld [vmem:[%s279] sm:$0xff]
      %v391 = vld [vmem:[%s279 + $0x8] sm:$0xff]
      %v392 = vld [vmem:[%s279 + $0x10] sm:$0xff]
      %v393 = vld [vmem:[%s279 + $0x18] sm:$0xff]
      %v394 = vld [vmem:[%s279 + $0x20] sm:$0xff]
      %v395 = vld [vmem:[%s279 + $0x28] sm:$0xff]
      %v396 = vld [vmem:[%s279 + $0x30] sm:$0xff]
      %v397 = vld [vmem:[%s279 + $0x38] sm:$0xff]
      %v398 = vld [vmem:[%s279 + $0x40] sm:$0xff]
      %v399 = vld [vmem:[%s279 + $0x48] sm:$0xff]
      %v400 = vld [vmem:[%s279 + $0x50] sm:$0xff]
      %v401 = vld [vmem:[%s279 + $0x58] sm:$0xff]
      %v402 = vld [vmem:[%s279 + $0x60] sm:$0xff]
      %v403 = vld [vmem:[%s279 + $0x68] sm:$0xff]
      %v404 = vld [vmem:[%s279 + $0x70] sm:$0xff]
      %v405 = vld [vmem:[%s279 + $0x78] sm:$0xff]
      %406 = vmatprep.subr.mxu0 0.0
      %407 = vmatpush1.msra.mxu0 %v405
      %408 = vmatprep.subr.mxu0 0.0
      %409 = vmatpush1.msra.mxu0 %v404
      %410 = vmatprep.subr.mxu0 0.0
      %411 = vmatpush1.msra.mxu0 %v403
      %412 = vmatprep.subr.mxu0 0.0
      %413 = vmatpush1.msra.mxu0 %v402
      %414 = vmatprep.subr.mxu0 0.0
      %415 = vmatpush1.msra.mxu0 %v401
      %416 = vmatprep.subr.mxu0 0.0
      %417 = vmatpush1.msra.mxu0 %v400
      %418 = vmatprep.subr.mxu0 0.0
      %419 = vmatpush1.msra.mxu0 %v399
      %420 = vmatprep.subr.mxu0 0.0
      %421 = vmatpush1.msra.mxu0 %v398
      %422 = vmatprep.subr.mxu0 0.0
      %423 = vmatpush1.msra.mxu0 %v397
      %424 = vmatprep.subr.mxu0 0.0
      %425 = vmatpush1.msra.mxu0 %v396
      %426 = vmatprep.subr.mxu0 0.0
      %427 = vmatpush1.msra.mxu0 %v395
      %428 = vmatprep.subr.mxu0 0.0
      %429 = vmatpush1.msra.mxu0 %v394
      %430 = vmatprep.subr.mxu0 0.0
      %431 = vmatpush1.msra.mxu0 %v393
      %432 = vmatprep.subr.mxu0 0.0
      %433 = vmatpush1.msra.mxu0 %v392
      %434 = vmatprep.subr.mxu0 0.0
      %435 = vmatpush1.msra.mxu0 %v391
      %436 = vmatprep.subr.mxu0 0.0
      %437 = vmatpush1.msra.mxu0 %v390
      %438 = vmatprep.subr.mxu0 0.0
      %439 = vmatpush2.msra.mxu0 0.0
      %440 = vmatprep.subr.mxu0 0.0
      %441 = vmatpush2.msra.mxu0 0.0
      %442 = vmatprep.subr.mxu0 0.0
      %443 = vmatpush2.msra.mxu0 0.0
      %444 = vmatprep.subr.mxu0 0.0
      %445 = vmatpush2.msra.mxu0 0.0
      %446 = vmatprep.subr.mxu0 0.0
      %447 = vmatpush2.msra.mxu0 0.0
      %448 = vmatprep.subr.mxu0 0.0
      %449 = vmatpush2.msra.mxu0 0.0
      %450 = vmatprep.subr.mxu0 0.0
      %451 = vmatpush2.msra.mxu0 0.0
      %452 = vmatprep.subr.mxu0 0.0
      %453 = vmatpush2.msra.mxu0 0.0
      %454 = vmatprep.subr.mxu0 0.0
      %455 = vmatpush2.msra.mxu0 0.0
      %456 = vmatprep.subr.mxu0 0.0
      %457 = vmatpush2.msra.mxu0 0.0
      %458 = vmatprep.subr.mxu0 0.0
      %459 = vmatpush2.msra.mxu0 0.0
      %460 = vmatprep.subr.mxu0 0.0
      %461 = vmatpush2.msra.mxu0 0.0
      %462 = vmatprep.subr.mxu0 0.0
      %463 = vmatpush2.msra.mxu0 0.0
      %464 = vmatprep.subr.mxu0 0.0
      %465 = vmatpush2.msra.mxu0 0.0
      %466 = vmatprep.subr.mxu0 0.0
      %467 = vmatpush2.msra.mxu0 0.0
      %468 = vmatprep.subr.mxu0 0.0
      %469 = vmatpush2.msra.mxu0 0.0
      %470 = vmatprep.mubr.f32.mxu0 0.0
      %471 = vmatmul.mubr.f32.gmra.mxu0 %v388
      %v472 = vpop.f32.mrf.mxu0
      %v473 = vadd.f32 0.0, %v472
      %v474 = vpop.f32.mrf.mxu0
      %475 = vdwg.mxu0
      %v476 = vadd.f32 %v389, %v473
      %477 = vst [vmem:[%s284] sm:$0xff] %v476
      // Predicated region
      $region45: #{mlp_layer.1} parent=39 // pred_check
        %p478 = pneg %p285
      $region46: #{mlp_layer.1} parent=39 // pred_check_branch
        %480 = sbr.rel (%p478) target = $region48
      $region47: #{mlp_layer.1} parent=39 // pred_region
        %v481 = vld [vmem:[%s284] sm:$0xff]
        %v482 = vld [vmem:[%s4] sm:$0x1]
        %v484 = vlaneseq
        %v485 = vshrl.u32 %v484, 7
        %v486 = vsub.s32 0, %v485
        %v487 = vrot.slane %v482, %v486
        %v489 = vadd.f32 %v481, %v487
        %490 = vst [vmem:[%s284] sm:$0xff] %v489
      $region48: #{mlp_layer.1} parent=39 // pred_fallthru
        _
      %p491 = scmp.lt.s32.totalorder %s20, 1
      %s492 = scalar_select %p491, %s20, 1
      %s493 = smul.addr %s492, 8
      %s494 = scalar_lea.vmem %s5, %s493
      // Predicated region
      $region49: #{mlp_layer.1} parent=39 // pred_check
        %p495 = pneg %p171
      $region50: #{mlp_layer.1} parent=39 // pred_check_branch
        %497 = sbr.rel (%p495) target = $region52
      $region51: #{mlp_layer.1} parent=39 // pred_region
        _
      $region52: #{mlp_layer.1} parent=39 // pred_fallthru
        _
    $region40: #{mlp_layer.1} parent=5 // pred_fallthru
      _
    %p498 = scmp.le.s32.totalorder 2, %s11
    // Predicated region
    $region53: #{mlp_layer.1} parent=5 // pred_check
      %p499 = pneg %p498
    $region54: #{mlp_layer.1} parent=5 // pred_check_branch
      %501 = sbr.rel (%p499) target = $region56
    $region55: #{mlp_layer.1} parent=5 // pred_region
      %s502 = ssub.s32 %s11, 2
      // Predicated region
      $region57: #{mlp_layer.1} parent=55 // pred_check
        %p503 = pneg %p177
      $region58: #{mlp_layer.1} parent=55 // pred_check_branch
        %505 = sbr.rel (%p503) target = $region60
      $region59: #{mlp_layer.1} parent=55 // pred_region
        %p506 = scmp.lt.s32.totalorder %s22, 1
        %s507 = scalar_select %p506, %s22, 1
        %s508 = smul.addr %s507, 8
        %s509 = scalar_lea.vmem %s5, %s508
      $region60: #{mlp_layer.1} parent=55 // pred_fallthru
        _
    $region56: #{mlp_layer.1} parent=5 // pred_fallthru
      _
  $region6: #{mlp_layer.1} parent=0 // loop_footer
    %s15 = sadd.s32 1, %s11
  $region7: #{mlp_layer.1} parent=0 // loop_footer_branch
    %10 = sbr.rel target = $region3
  $region8: #{mlp_layer.1} parent=0 // loop_exit
    _

</llo_original>
